<compile_context>
chip_gen: v7x
topology: tpu7x:2x2x1
jax: 0.10.0
libtpu: 0.0.40
codegen_flags: <defaults>
</compile_context>

<pallas_src>
import functools

import jax
import jax.numpy as jnp
from jax import lax
from jax.experimental import pallas as pl
from jax.experimental.pallas import tpu as pltpu

DIMW = 5
LAMBDA = 2.0
PARAM_SIGMA = 12.0


# ----------------------------------------------------------------------------
# Device-dependent defaults (VMEM limit / row-tile size / elementwise dtype).
# ----------------------------------------------------------------------------
def _device_defaults():
    try:
        kind = jax.devices()[0].device_kind.lower()
    except Exception:
        kind = ""
    if "v5" in kind or "v6" in kind:
        # 128 MiB VMEM parts: big row tiles, raised scoped-VMEM limit.
        # v5 has no bf16 VALU -> keep the nonlinearity in f32 there.
        ew = jnp.float32 if "v5" in kind else jnp.bfloat16
        return dict(vmem_limit=80 * 1024 * 1024, block_rows=64, ew_dtype=ew)
    if "7" in kind:
        # v7x: 64 MiB physical VMEM, 2 TensorCores -> smaller tiles.
        return dict(vmem_limit=48 * 1024 * 1024, block_rows=32,
                    ew_dtype=jnp.bfloat16)
    # Unknown part: leave the scoped limit at its default, conservative tiles.
    return dict(vmem_limit=None, block_rows=32, ew_dtype=jnp.bfloat16)


def _largest_divisor_leq(n, cap):
    cap = max(1, min(n, cap))
    while n % cap:
        cap -= 1
    return cap


def _min_two_grid_points(N, nb, n_tiles):
    # Guarantee >=2 parallel grid points when possible (v7x has 2 TensorCores).
    if N >= 2 and (N // nb) * n_tiles < 2:
        nb = _largest_divisor_leq(N, max(1, N // 2))
    return nb


def _shrink_tiles(est, N, nb, r_out, tiled, budget):
    """Shrink (batch-fold, row-tile) until the rough per-tile VMEM estimate fits."""
    while est(nb, r_out, tiled) > budget:
        if nb > 1:
            nb = _largest_divisor_leq(N, nb - 1)
        elif r_out > 8:
            tiled = True
            r_out = max(8, ((r_out - 1) // 8) * 8)
        else:
            break
    return nb, r_out, tiled


# ----------------------------------------------------------------------------
# Pallas kernel A: "folded" path (large Cin).  One tile = NB batch x out_rows rows.
# ----------------------------------------------------------------------------
def _inrf_folded_kernel(*refs, dimW, stride, lam, Cin, has_halo, has_res, relu,
                        groups, ew_dtype):
    """refs: xm, [xh], [res], w, o, [xs scratch], blk scratch, [acc scratch]

    xm_ref: (NB, R_main, s, WB, s*Cin)  folded padded input rows of this tile (bf16)
    xh_ref: (NB, halo,  s, WB, s*Cin)   next rows (halo), only when row-tiled
    res_ref:(NB, out_rows, Wo, Cout)    optional residual to add in the epilogue
    w_ref:  (dimW*dimW*Cin, Cout)       per-shift 1x1 weights flattened on K (bf16)
    o_ref:  (NB, out_rows, Wo, Cout)    output tile (bf16 or f32)
    xs_ref: staging scratch holding main+halo rows contiguously (no per-shift concat)
    blk_ref:(NB, out_rows, Wo, group*Cin) bf16 wide-K matmul lhs scratch
    acc_ref:(NB*out_rows*Wo, Cout) f32 partial-sum accumulator (multi-group only)
    """
    it = iter(refs)
    xm_ref = next(it)
    xh_ref = next(it) if has_halo else None
    res_ref = next(it) if has_res else None
    w_ref = next(it)
    o_ref = next(it)
    xs_ref = next(it) if has_halo else None
    blk_ref = next(it)
    acc_ref = next(it) if len(groups) > 1 else None

    NB, out_rows, Wo, Cout = o_ref.shape
    s = stride
    pad = dimW // 2
    M = NB * out_rows * Wo
    lam_v = jnp.asarray(lam, dtype=ew_dtype)

    # Stage main + halo rows contiguously once so per-shift loads never need a
    # row concatenate.
    if has_halo:
        r_main = xm_ref.shape[1]
        xs_ref[:, :r_main] = xm_ref[...]
        xs_ref[:, r_main:] = xh_ref[...]
        src = xs_ref
    else:
        src = xm_ref

    def load_shift(r, c):
        # Output pixel (y, x) of shift (r, c) reads padded input (y*s + r, x*s + c),
        # i.e. folded (row y + r//s, phase r%s, col x + c//s, channel slab c%s).
        rb, rp = divmod(r, s)
        cb, cp = divmod(c, s)
        return src[:, rb:rb + out_rows, rp, cb:cb + Wo, cp * Cin:(cp + 1) * Cin]
        # TODO(synk): produce the cb=1..4 column shifts with pltpu.roll (XLU) from a
        # once-per-phase full-width slab instead of sublane-offset slices.

    # Un-shifted input sampled at the strided output grid (shift == (pad, pad)).
    x0 = load_shift(pad, pad).astype(ew_dtype)

    acc = None
    for gi, (lo, hi) in enumerate(groups):
        # Each sub_i goes straight into its lane offset of the bf16 lhs scratch.
        for i in range(lo, hi):
            r, c = divmod(i, dimW)
            sh = load_shift(r, c).astype(ew_dtype)
            sub = sh + lam_v * jnp.maximum(x0 - sh, 0.0)   # sigma == 1 nonlinearity
            j = i - lo
            blk_ref[:, :, :, j * Cin:(j + 1) * Cin] = sub.astype(blk_ref.dtype)
        kw = (hi - lo) * Cin
        lhs = blk_ref[:, :, :, :kw].reshape(M, kw)
        # Wide-K bf16 matmul, f32 accumulation inside the MXU.
        part = jnp.dot(lhs, w_ref[lo * Cin:hi * Cin, :],
                       preferred_element_type=jnp.float32)
        if acc_ref is None:
            acc = part
        elif gi == 0:
            acc_ref[...] = part
        else:
            acc_ref[...] += part

    if acc_ref is not None:
        acc = acc_ref[...]
    out = acc.reshape(NB, out_rows, Wo, Cout)
    if relu:                                   # fused inter-layer ReLU
        out = jnp.maximum(out, 0.0)
    if has_res:                                # fused residual add
        out = out + res_ref[...].astype(jnp.float32)
    o_ref[...] = out.astype(o_ref.dtype)


# ----------------------------------------------------------------------------
# Pallas kernel B: pre-im2col path (small Cin, e.g. the Cin=3 first layer).
# ----------------------------------------------------------------------------
def _inrf_im2col_kernel(*refs, lam, relu, has_res, ew_dtype):
    """refs: slab (NB,R,Wo,K), x0_tiled (NB,R,Wo,K), [res], w (K,Cout), o."""
    it = iter(refs)
    slab_ref = next(it)
    x0_ref = next(it)
    res_ref = next(it) if has_res else None
    w_ref = next(it)
    o_ref = next(it)

    sh = slab_ref[...].astype(ew_dtype)
    x0 = x0_ref[...].astype(ew_dtype)
    lam_v = jnp.asarray(lam, dtype=ew_dtype)
    sub = sh + lam_v * jnp.maximum(x0 - sh, 0.0)

    NB, R, Wo, K = slab_ref.shape
    Cout = o_ref.shape[-1]
    acc = jnp.dot(sub.astype(jnp.bfloat16).reshape(NB * R * Wo, K), w_ref[...],
                  preferred_element_type=jnp.float32)
    out = acc.reshape(NB, R, Wo, Cout)
    if relu:
        out = jnp.maximum(out, 0.0)
    if has_res:
        out = out + res_ref[...].astype(jnp.float32)
    o_ref[...] = out.astype(o_ref.dtype)


# ----------------------------------------------------------------------------
# Wrapper: pad + transpose-free stride fold (or pre-im2col) in plain JAX, then
# call the kernel with a row/batch-tiled grid.
# ----------------------------------------------------------------------------
def inrf_pallas(x, w, *, stride=1, lam=LAMBDA, dimW=DIMW, relu=False, residual=None,
                out_dtype=jnp.bfloat16, block_rows=None, m_fold_target=2048,
                vmem_limit=None, ew_dtype=None):
    """One INRF layer (sigma == 1), with optionally fused ReLU / residual epilogue.

    x: (N, H, W, Cin) NHWC.  w: (dimW*dimW, Cin, Cout).
    residual: optional (N, Ho, Wo, Cout) added to the (optionally ReLU'ed) output.
    Returns (N, Ho, Wo, Cout) in `out_dtype`, Ho = ceil(H/stride), Wo = ceil(W/stride).
    """
    defaults = _device_defaults()
    if block_rows is None:
        block_rows = defaults["block_rows"]
    if vmem_limit is None:
        vmem_limit = defaults["vmem_limit"]
    if ew_dtype is None:
        ew_dtype = defaults["ew_dtype"]

    N, H, W, Cin = x.shape
    k2, cin2, Cout = w.shape
    assert k2 == dimW * dimW and cin2 == Cin
    s = int(stride)
    pad = dimW // 2
    Ho = -(-H // s)
    Wo = -(-W // s)
    n_shift = dimW * dimW
    out_bytes = jnp.dtype(out_dtype).itemsize

    # Lane-pad small Cout so output stores are unmasked; sliced back after the call.
    Cout_eff = Cout
    if Cout < 128 and Cout % 128 and residual is None:
        Cout_eff = 128

    budget = (vmem_limit if vmem_limit is not None else 32 * 1024 * 1024) * 2 // 3
    has_res = residual is not None
    use_im2col = n_shift * Cin <= 256      # e.g. Cin=3 -> lane-dense K=75 slab

    w_flat = w.astype(jnp.bfloat16).reshape(n_shift * Cin, Cout)
    if Cout_eff != Cout:
        w_flat = jnp.pad(w_flat, ((0, 0), (0, Cout_eff - Cout)))

    if use_im2col:
        # ---- pre-im2col in XLA (tiny layer): (N, Ho, Wo, n_shift*Cin) shift slab ----
        K = n_shift * Cin
        xb = x.astype(jnp.bfloat16)
        xp = jnp.pad(xb, ((0, 0), (pad, pad), (pad, pad), (0, 0)))
        slabs = []
        for i in range(n_shift):
            r, c = divmod(i, dimW)
            slabs.append(lax.slice(
                xp, (0, r, c, 0),
                (N, r + (Ho - 1) * s + 1, c + (Wo - 1) * s + 1, Cin),
                (1, s, s, 1)))
        slab = jnp.concatenate(slabs, axis=-1)                       # (N,Ho,Wo,K)
        x0t = jnp.tile(slabs[pad * dimW + pad], (1, 1, 1, n_shift))  # x0 per shift

        if Ho <= block_rows:
            tiled, r_out = False, Ho
        else:
            tiled, r_out = True, max(8, (block_rows // 8) * 8)
        nb = _largest_divisor_leq(N, max(1, m_fold_target // max(1, r_out * Wo)))

        def est(nb_, r_, tiled_):
            m_ = nb_ * r_ * Wo
            b = 2 * 2 * m_ * K * 2                     # slab + x0t blocks (x2 buffers)
            b += 2 * m_ * Cout_eff * out_bytes         # output block
            if has_res:
                b += 2 * m_ * Cout_eff * 2
            b += K * Cout_eff * 2                      # weights
            return b

        nb, r_out, tiled = _shrink_tiles(est, N, nb, r_out, tiled, budget)
        n_tiles = -(-Ho // r_out) if tiled else 1
        nb = _min_two_grid_points(N, nb, n_tiles)
        rows_pad = n_tiles * r_out

        if rows_pad != Ho:
            slab = jnp.pad(slab, ((0, 0), (0, rows_pad - Ho), (0, 0), (0, 0)))
            x0t = jnp.pad(x0t, ((0, 0), (0, rows_pad - Ho), (0, 0), (0, 0)))

        io_spec = pl.BlockSpec((nb, r_out, Wo, Cout_eff), lambda n, t: (n, t, 0, 0))
        sl_spec = pl.BlockSpec((nb, r_out, Wo, K), lambda n, t: (n, t, 0, 0))
        inputs = [slab, x0t]
        in_specs = [sl_spec, sl_spec]
        if has_res:
            res = residual.astype(jnp.bfloat16)
            if rows_pad != Ho:
                res = jnp.pad(res, ((0, 0), (0, rows_pad - Ho), (0, 0), (0, 0)))
            inputs.append(res)
            in_specs.append(io_spec)
        inputs.append(w_flat)
        # Constant block index -> the weight tile stays resident (no per-step re-DMA).
        in_specs.append(pl.BlockSpec((K, Cout_eff), lambda n, t: (0, 0)))
        scratch = []

        kernel = functools.partial(_inrf_im2col_kernel, lam=lam, relu=relu,
                                   has_res=has_res, ew_dtype=ew_dtype)
    else:
        # ---- folded path: (N, HB, s, WB, s*Cin) layout-compatible stride fold ----
        halo = (dimW - 1) // s
        wb = -(-(W + 2 * pad) // s)

        if Ho <= block_rows:
            tiled, r_out = False, Ho
        else:
            tiled, r_out = True, max(8, (block_rows // 8) * 8)
        nb = _largest_divisor_leq(N, max(1, m_fold_target // max(1, r_out * Wo)))

        def pick_group(m_):
            if n_shift * Cin <= 1024:
                return n_shift                 # single wide-K matmul
            g = max(1, min(n_shift, 1024 // Cin))       # K up to 1024 per dot
            # keep the per-group bf16 lhs scratch <= ~8 MiB (v7x VMEM headroom)
            cap = max(1, (8 * 1024 * 1024) // max(1, m_ * Cin * 2))
            return max(1, min(g, cap))

        def est(nb_, r_, tiled_):
            m_ = nb_ * r_ * Wo
            g = pick_group(m_)
            ng = -(-n_shift // g)
            row_b = nb_ * s * wb * s * Cin * 2
            main_rows = r_ if tiled_ else r_ + halo
            b = 2 * main_rows * row_b                    # main input block (x2 buffers)
            if tiled_ and halo > 0:
                b += 2 * halo * row_b                    # halo block (x2 buffers)
                b += (r_ + halo) * row_b                 # staging scratch
            b += m_ * g * Cin * 2                        # bf16 lhs scratch
            if ng > 1:
                b += m_ * Cout_eff * 4                   # f32 accumulator scratch
            b += 2 * m_ * Cout_eff * out_bytes           # output block
            if has_res:
                b += 2 * m_ * Cout_eff * 2
            b += n_shift * Cin * Cout_eff * 2            # weights
            return b

        nb, r_out, tiled = _shrink_tiles(est, N, nb, r_out, tiled, budget)
        n_tiles = -(-Ho // r_out) if tiled else 1
        nb = _min_two_grid_points(N, nb, n_tiles)

        use_halo = tiled and halo > 0
        M_tile = nb * r_out * Wo
        group = pick_group(M_tile)
        groups = tuple((lo, min(n_shift, lo + group))
                       for lo in range(0, n_shift, group))
        assert (not use_halo) or (r_out % halo == 0), (r_out, halo)

        hb_rows = (n_tiles * r_out + halo) if tiled else (Ho + halo)
        hp, wp = hb_rows * s, wb * s
        xp = jnp.pad(x.astype(jnp.bfloat16),
                     ((0, 0), (pad, hp - H - pad), (pad, wp - W - pad), (0, 0)))
        xf = xp.reshape(N, hb_rows, s, wb, s * Cin)      # pure reshape, no HBM transpose

        r_main = r_out if tiled else Ho + halo
        io_spec = pl.BlockSpec((nb, r_out, Wo, Cout_eff), lambda n, t: (n, t, 0, 0))
        inputs = [xf]
        in_specs = [pl.BlockSpec((nb, r_main, s, wb, s * Cin),
                                 lambda n, t: (n, t, 0, 0, 0))]
        if use_halo:
            hb_per = r_out // halo
            inputs.append(xf)
            in_specs.append(pl.BlockSpec(
                (nb, halo, s, wb, s * Cin),
                lambda n, t: (n, (t + 1) * hb_per, 0, 0, 0)))
        if has_res:
            res = residual.astype(jnp.bfloat16)
            rows_pad = n_tiles * r_out
            if rows_pad != Ho:
                res = jnp.pad(res, ((0, 0), (0, rows_pad - Ho), (0, 0), (0, 0)))
            inputs.append(res)
            in_specs.append(io_spec)
        inputs.append(w_flat)
        # Constant block index -> the weight tile stays resident (no per-step re-DMA).
        in_specs.append(pl.BlockSpec((n_shift * Cin, Cout_eff), lambda n, t: (0, 0)))

        scratch = []
        if use_halo:
            scratch.append(pltpu.VMEM((nb, r_out + halo, s, wb, s * Cin),
                                      jnp.bfloat16))
        scratch.append(pltpu.VMEM((nb, r_out, Wo, group * Cin), jnp.bfloat16))
        if len(groups) > 1:
            scratch.append(pltpu.VMEM((M_tile, Cout_eff), jnp.float32))

        kernel = functools.partial(
            _inrf_folded_kernel, dimW=dimW, stride=s, lam=lam, Cin=Cin,
            has_halo=use_halo, has_res=has_res, relu=relu, groups=groups,
            ew_dtype=ew_dtype)

    grid = (N // nb, n_tiles)
    rows_out = n_tiles * r_out
    out_specs = pl.BlockSpec((nb, r_out, Wo, Cout_eff), lambda n, t: (n, t, 0, 0))

    flops = (2.0 * N * Ho * Wo * n_shift * Cin * Cout_eff
             + 4.0 * N * Ho * Wo * n_shift * Cin)
    bytes_acc = sum(int(a.size) * a.dtype.itemsize for a in inputs)
    bytes_acc += N * rows_out * Wo * Cout_eff * out_bytes
    cost = pl.CostEstimate(flops=int(flops), transcendentals=0,
                           bytes_accessed=int(bytes_acc))

    out = pl.pallas_call(
        kernel,
        out_shape=jax.ShapeDtypeStruct((N, rows_out, Wo, Cout_eff), out_dtype),
        grid=grid,
        in_specs=in_specs,
        out_specs=out_specs,
        scratch_shapes=scratch,
        compiler_params=pltpu.CompilerParams(
            dimension_semantics=("parallel", "parallel"),
            vmem_limit_bytes=vmem_limit),
        cost_estimate=cost,
    )(*inputs)

    if rows_out != Ho:
        out = out[:, :Ho]
    if Cout_eff != Cout:
        out = out[..., :Cout]
    return out


# ----------------------------------------------------------------------------
# Pure-JAX reference sharing the kernel numerics (bf16 in, f32 accumulate).
# ----------------------------------------------------------------------------
def inrf_reference(x, w, *, stride=1, lam=LAMBDA, dimW=DIMW, relu=False,
                   residual=None, out_dtype=jnp.float32, ew_dtype=jnp.bfloat16):
    N, H, W, Cin = x.shape
    pad = dimW // 2
    s = stride
    Ho = -(-H // s)
    Wo = -(-W // s)
    xp = jnp.pad(x.astype(jnp.bfloat16), ((0, 0), (pad, pad), (pad, pad), (0, 0)))
    lam_v = jnp.asarray(lam, ew_dtype)
    x0 = lax.slice(xp, (0, pad, pad, 0),
                   (N, pad + (Ho - 1) * s + 1, pad + (Wo - 1) * s + 1, Cin),
                   (1, s, s, 1)).astype(ew_dtype)
    out = jnp.zeros((N, Ho, Wo, w.shape[-1]), jnp.float32)
    for i in range(dimW * dimW):
        r, c = divmod(i, dimW)
        sh = lax.slice(xp, (0, r, c, 0),
                       (N, r + (Ho - 1) * s + 1, c + (Wo - 1) * s + 1, Cin),
                       (1, s, s, 1)).astype(ew_dtype)
        sub = (sh + lam_v * jnp.maximum(x0 - sh, 0.0)).astype(jnp.bfloat16)
        out = out + jnp.einsum('nhwc,cd->nhwd', sub, w[i].astype(jnp.bfloat16),
                               preferred_element_type=jnp.float32)
    if relu:
        out = jnp.maximum(out, 0.0)
    if residual is not None:
        out = out + residual.astype(jnp.bfloat16).astype(jnp.float32)
    return out.astype(out_dtype)


# ----------------------------------------------------------------------------
# Parameters & full AnalysisTransformer forward.
# ----------------------------------------------------------------------------
def make_inrf_weights(key, cin, cout, dimW=DIMW):
    # PyTorch: w = randn(dimW*dimW, cout, cin, 1, 1) / paramSigma  (per-shift 1x1 convs).
    # Stored pre-transposed as (dimW*dimW, cin, cout); cast to bf16 at the MXU boundary.
    return jax.random.normal(key, (dimW * dimW, cin, cout), jnp.float32) / PARAM_SIGMA
    # TODO(synk): the Conv2d `g` and `pandQ` parameters are dead in forward() for
    # sigma == 1 and are intentionally not materialized.


def init_params(key):
    keys = iter(jax.random.split(key, 21))
    p = {}
    p['inrf1'] = make_inrf_weights(next(keys), 3, 128)
    for rb in ('rb1', 'rb2'):
        p[rb] = (make_inrf_weights(next(keys), 128, 128),
                 make_inrf_weights(next(keys), 128, 128))
    p['inrf2'] = make_inrf_weights(next(keys), 128, 128)
    for rb in ('rb3', 'rb4'):
        p[rb] = (make_inrf_weights(next(keys), 128, 128),
                 make_inrf_weights(next(keys), 128, 128))
    p['inrf3'] = make_inrf_weights(next(keys), 128, 128)
    for rb in ('rb5', 'rb6'):
        p[rb] = (make_inrf_weights(next(keys), 128, 128),
                 make_inrf_weights(next(keys), 128, 128))
    p['inrf4'] = make_inrf_weights(next(keys), 128, 128)
    for rb in ('rb7', 'rb8'):
        p[rb] = (make_inrf_weights(next(keys), 128, 128),
                 make_inrf_weights(next(keys), 128, 128))
    p['inrf5'] = make_inrf_weights(next(keys), 128, 64)
    return p


def residual_block(x, w1, w2):
    # x -> inrf2( relu( inrf1(x) ) ) + x, with ReLU and +x fused into the kernels
    # (activations stay bf16 between layers; no separate XLA relu/add round trips).
    y = inrf_pallas(x, w1, stride=1, relu=True)
    return inrf_pallas(y, w2, stride=1, residual=x)


def analysis_transformer(img_nchw, params):
    # NCHW in/out (PyTorch convention); NHWC + bf16 inside so channels ride TPU lanes.
    x = jnp.transpose(img_nchw, (0, 2, 3, 1)).astype(jnp.bfloat16)
    x = inrf_pallas(x, params['inrf1'], stride=2)
    x = residual_block(x, *params['rb1'])
    x = residual_block(x, *params['rb2'])
    x = inrf_pallas(x, params['inrf2'], stride=2)
    x = residual_block(x, *params['rb3'])
    x = residual_block(x, *params['rb4'])
    x = inrf_pallas(x, params['inrf3'], stride=2)
    x = residual_block(x, *params['rb5'])
    x = residual_block(x, *params['rb6'])
    x = inrf_pallas(x, params['inrf4'], stride=2)
    x = residual_block(x, *params['rb7'])
    x = residual_block(x, *params['rb8'])
    x = inrf_pallas(x, params['inrf5'], stride=1, out_dtype=jnp.float32)
    return jnp.transpose(x, (0, 3, 1, 2))


if __name__ == "__main__":
    key = jax.random.PRNGKey(0)
    pkey, xkey, k1, k2, k3 = jax.random.split(key, 5)
    params = init_params(pkey)
    img = jax.random.normal(xkey, (2, 3, 16, 16), jnp.float32)  # NCHW, like PyTorch

    def check(got, want, tag, tol=5e-3):
        g = got.astype(jnp.float32)
        w_ = want.astype(jnp.float32)
        err = float(jnp.max(jnp.abs(g - w_)))
        assert jnp.allclose(g, w_, rtol=tol, atol=tol), f"{tag}: max err {err}"

    ew = _device_defaults()["ew_dtype"]

    # A) pre-im2col path (Cin=3), stride 1 and 2, vs. the pure-JAX reference.
    x_nhwc = jnp.transpose(img, (0, 2, 3, 1))
    for s in (1, 2):
        got = inrf_pallas(x_nhwc, params['inrf1'], stride=s, out_dtype=jnp.float32)
        want = inrf_reference(x_nhwc, params['inrf1'], stride=s, ew_dtype=ew)
        check(got, want, f"im2col stride={s}")

    # B) folded path (Cin=128), row-tiled with halo + fused relu/residual epilogue.
    xb = jax.random.normal(k1, (1, 20, 16, 128), jnp.float32)
    wb_ = jax.random.normal(k2, (DIMW * DIMW, 128, 128), jnp.float32) / PARAM_SIGMA
    rb_ = jax.random.normal(k3, (1, 20, 16, 128), jnp.float32)
    got = inrf_pallas(xb, wb_, stride=1, relu=True, residual=rb_,
                      out_dtype=jnp.float32, block_rows=8)
    want = inrf_reference(xb, wb_, stride=1, relu=True, residual=rb_, ew_dtype=ew)
    check(got, want, "folded tiled stride=1 relu+residual")

    got = inrf_pallas(xb, wb_, stride=2, out_dtype=jnp.float32, block_rows=8)
    want = inrf_reference(xb, wb_, stride=2, ew_dtype=ew)
    check(got, want, "folded tiled stride=2")

    # C) folded path, untiled (deep-layer shapes), Cout=64 lane padding.
    xc = jax.random.normal(k1, (2, 8, 8, 128), jnp.float32)
    wc = jax.random.normal(k2, (DIMW * DIMW, 128, 64), jnp.float32) / PARAM_SIGMA
    got = inrf_pallas(xc, wc, stride=1, out_dtype=jnp.float32)
    want = inrf_reference(xc, wc, stride=1, ew_dtype=ew)
    check(got, want, "folded untiled Cout=64")

    # Full AnalysisTransformer forward.
    out = jax.jit(analysis_transformer)(img, params)
    out = jax.block_until_ready(out)
    assert out.shape == (2, 64, 1, 1), out.shape
    assert out.dtype == jnp.float32
    print("KERNEL_OK")
</pallas_src>

<mosaic_0001>
module attributes {stable_mosaic.version = 11 : i64} {
  func.func @_inrf_im2col_kernel(%arg0: i32, %arg1: i32, %arg2: memref<1x16x16x75xbf16, #tpu.memory_space<vmem>>, %arg3: memref<1x16x16x75xbf16, #tpu.memory_space<vmem>>, %arg4: memref<75x128xbf16, #tpu.memory_space<vmem>>, %arg5: memref<1x16x16x128xf32, #tpu.memory_space<vmem>>) attributes {dimension_semantics = [#tpu.dimension_semantics<parallel>, #tpu.dimension_semantics<parallel>], iteration_bounds = array<i64: 2, 1>, scalar_prefetch = 0 : i64, scratch_operands = 0 : i64, tpu.core_type = #tpu.core_type<tc>, window_params = [{transform_indices = @transform_0, window_bounds = array<i64: 1, 16, 16, 75>}, {transform_indices = @transform_1, window_bounds = array<i64: 1, 16, 16, 75>}, {pipeline_mode = #tpu.pipeline_mode<synchronous>, transform_indices = @transform_2, window_bounds = array<i64: 75, 128>}, {transform_indices = @transform_3, window_bounds = array<i64: 1, 16, 16, 128>}]} {
    %c0 = arith.constant 0 : index
    %c0_0 = arith.constant 0 : index
    %c0_1 = arith.constant 0 : index
    %c0_2 = arith.constant 0 : index
    %0 = vector.load %arg2[%c0, %c0_0, %c0_1, %c0_2] : memref<1x16x16x75xbf16, #tpu.memory_space<vmem>>, vector<1x16x16x75xbf16>
    %c0_3 = arith.constant 0 : index
    %c0_4 = arith.constant 0 : index
    %c0_5 = arith.constant 0 : index
    %c0_6 = arith.constant 0 : index
    %1 = vector.load %arg3[%c0_3, %c0_4, %c0_5, %c0_6] : memref<1x16x16x75xbf16, #tpu.memory_space<vmem>>, vector<1x16x16x75xbf16>
    %2 = arith.subf %1, %0 : vector<1x16x16x75xbf16>
    %cst = arith.constant 0.000000e+00 : bf16
    %3 = vector.broadcast %cst : bf16 to vector<1x16x16x75xbf16>
    %4 = arith.maximumf %2, %3 : vector<1x16x16x75xbf16>
    %cst_7 = arith.constant 2.000000e+00 : bf16
    %5 = vector.broadcast %cst_7 : bf16 to vector<1x16x16x75xbf16>
    %6 = arith.mulf %5, %4 : vector<1x16x16x75xbf16>
    %7 = arith.addf %0, %6 : vector<1x16x16x75xbf16>
    %8 = vector.shape_cast %7 : vector<1x16x16x75xbf16> to vector<256x75xbf16>
    %c0_8 = arith.constant 0 : index
    %c0_9 = arith.constant 0 : index
    %9 = vector.load %arg4[%c0_8, %c0_9] : memref<75x128xbf16, #tpu.memory_space<vmem>>, vector<75x128xbf16>
    %cst_10 = arith.constant dense<0.000000e+00> : vector<256x128xf32>
    %10 = tpu.matmul %8, %9, %cst_10 {dimension_numbers = #tpu.dot_dimension_numbers<[1], [0], [0], [1], [0, 0, 1, 1], [], []>} : vector<256x75xbf16>, vector<75x128xbf16>, vector<256x128xf32> -> vector<256x128xf32>
    %11 = vector.shape_cast %10 : vector<256x128xf32> to vector<1x16x16x128xf32>
    %c0_11 = arith.constant 0 : index
    %c0_12 = arith.constant 0 : index
    %c0_13 = arith.constant 0 : index
    %c0_14 = arith.constant 0 : index
    %12 = vector.load %arg5[%c0_11, %c0_12, %c0_13, %c0_14] : memref<1x16x16x128xf32, #tpu.memory_space<vmem>>, vector<1x16x16x128xf32>
    tpu.vector_store %arg5[%c0_11, %c0_12, %c0_13, %c0_14], %11 {strides = array<i32>} : memref<1x16x16x128xf32, #tpu.memory_space<vmem>>, vector<1x16x16x128xf32>,
    return
  }
  func.func @transform_0(%arg0: i32, %arg1: i32) -> (i32, i32, i32, i32) {
    %c0_i32 = arith.constant 0 : i32
    %c0_i32_0 = arith.constant 0 : i32
    %c0_i32_1 = arith.constant 0 : i32
    return %arg0, %arg1, %c0_i32, %c0_i32_0 : i32, i32, i32, i32
  }
  func.func @transform_1(%arg0: i32, %arg1: i32) -> (i32, i32, i32, i32) {
    %c0_i32 = arith.constant 0 : i32
    %c0_i32_0 = arith.constant 0 : i32
    %c0_i32_1 = arith.constant 0 : i32
    return %arg0, %arg1, %c0_i32, %c0_i32_0 : i32, i32, i32, i32
  }
  func.func @transform_2(%arg0: i32, %arg1: i32) -> (i32, i32) {
    %c0_i32 = arith.constant 0 : i32
    %c0_i32_0 = arith.constant 0 : i32
    %c0_i32_1 = arith.constant 0 : i32
    return %c0_i32, %c0_i32_0 : i32, i32
  }
  func.func @transform_3(%arg0: i32, %arg1: i32) -> (i32, i32, i32, i32) {
    %c0_i32 = arith.constant 0 : i32
    %c0_i32_0 = arith.constant 0 : i32
    %c0_i32_1 = arith.constant 0 : i32
    return %arg0, %arg1, %c0_i32, %c0_i32_0 : i32, i32, i32, i32
  }
}

</mosaic_0001>

<llo_original>
// kernel: tpu_custom_call.1
$region0: #{tpu_custom_call.1}
  #allocation0 [shape = 'u32[]', space=smem, size = 0x4, offset = 0x4, fixed_abs, tag = 'smem constant byte address 0x4 - core index']
  #allocation1 [shape = 'u32[144,128]{1,0:T(1,128)}', space=vmem, size = 0x12000, scoped, tag = 'internal scratch']
  %s0 = inlined_call_operand.hbm [shape: bf16[2,16,16,75], index: 0, kind: input, shape index: {}]
  %s1 = inlined_call_operand.hbm [shape: bf16[2,16,16,75], index: 1, kind: input, shape index: {}]
  %s2 = inlined_call_operand.hbm [shape: bf16[75,128], index: 2, kind: input, shape index: {}]
  %s3 = inlined_call_operand.hbm [shape: f32[2,16,16,128], index: 3, kind: output, shape index: {}]
  %s4 = sld [smem:[#allocation0]]
  $region57: #{tpu_custom_call.1} parent=0
    _
  %s6 = ssub.s32 1, %s4
  %s7 = scalar_select 0, %s6, %s4
  $region1: #{tpu_custom_call.1} parent=0
    #allocation2 [shape = 'u8[131072]{0}', space=vmem, size = 0x20000, scoped, tag = 'input window, operand 0']
    #allocation3 [shape = 's32[2]{0}', space=sflag, size = 0x8, scoped, tag = 'scoped memory for tpu_custom_call.1']
    #allocation4 [shape = 's32[2]{0}', space=sflag, size = 0x8, scoped, tag = 'scoped memory for tpu_custom_call.1']
    #allocation5 [shape = 'u8[131072]{0}', space=vmem, size = 0x20000, scoped, tag = 'input window, operand 1']
    #allocation6 [shape = 's32[2]{0}', space=sflag, size = 0x8, scoped, tag = 'scoped memory for tpu_custom_call.1']
    #allocation7 [shape = 'u8[20480]{0}', space=vmem, size = 0x5000, scoped, tag = 'input window, operand 2, single buffered']
    #allocation8 [shape = 'u8[262144]{0}', space=vmem, size = 0x40000, scoped, tag = 'output window, operand 0']
    %8 = vsyncpa [#allocation3], 0
    %s9 = scalar_lea.sflag [#allocation3], 1
    %10 = vsyncpa %s9, 0
    %11 = vsyncpa [#allocation6], 0
    %s12 = scalar_lea.sflag [#allocation6], 1
    %13 = vsyncpa %s12, 0
    %14 = vsyncpa [#allocation4], 0
    %s15 = scalar_lea.sflag [#allocation4], 1
    %16 = vsyncpa %s15, 0
    loop: start=0, step=1, limit=4
    $region2: #{tpu_custom_call.1} parent=1 // loop_pre_header
      _
    $region3: #{tpu_custom_call.1} parent=1 // loop_header
      %s18 = sphi 0, %s22
      %p19 = scmp.ge.s32.totalorder %s18, 4
      %s25 = sphi 0, %s37
      %s26 = sphi 0, %s33
      %s27 = sphi 0, %s25
      %s28 = sphi 0, %s26
      %s29 = sphi 0, %s27
      %s30 = sphi 0, %s28
      %s42 = sphi 0, %s44
      %s45 = sphi 0, %s42
      %s46 = sphi 0, %s45
      %s62 = sphi 0, %s46
      %s70 = sphi 0, %s72
      %s73 = sphi 0, %s70
      %s74 = sphi 0, %s73
      %s90 = sphi 0, %s74
      %s94 = sphi 0, %s94
      %s96 = sphi 0, %s94
      %s97 = sphi 0, %s96
      %s111 = sphi 0, %s97
      %s119 = sphi 0, %s121
      %s122 = sphi 0, %s119
      %s123 = sphi 0, %s122
      %s139 = sphi 0, %s123
    $region4: #{tpu_custom_call.1} parent=1 // loop_header_branch
      %21 = sbr.rel (%p19) target = $region8
    $region5: #{tpu_custom_call.1} parent=1 // loop_body
      %s23 = ssub.s32 %s18, 1
      %s24 = ssub.s32 %s18, 2
      %s31 = sadd.s32 1, %s26
      %p32 = scmp.ge.s32.totalorder %s31, 1
      %s33 = scalar_select %p32, 0, %s31
      %s34 = sadd.s32 1, %s25
      %s35 = scalar_select %p32, %s34, %s25
      %p36 = scmp.ge.s32.totalorder %s35, 2
      %s37 = scalar_select %p36, 0, %s35
      %s38 = ssub.s32 %s25, %s37
      %s39 = ssub.s32 %s26, %s33
      %s40 = sor.u32 %s38, %s39
      %p41 = scmp.eq.s32.totalorder %s40, 0
      %s43 = sadd.s32 %s42, 1
      %s44 = scalar_select %p41, %s42, %s43
      %p47 = pneg %p41
      %p48 = scmp.eq.s32.totalorder %s18, 1
      %p49 = por %p47, %p48
      %p50 = scmp.ne.s32.totalorder %s42, %s45
      %p51 = scmp.eq.s32.totalorder %s18, 0
      %p52 = por %p50, %p51
      %p53 = scmp.ne.s32.totalorder %s42, %s45
      %p54 = scmp.eq.s32.totalorder %s23, 1
      %p55 = por %p53, %p54
      %p56 = scmp.ne.s32.totalorder %s45, %s46
      %p57 = scmp.eq.s32.totalorder %s23, 0
      %p58 = por %p56, %p57
      %p59 = scmp.ne.s32.totalorder %s45, %s46
      %p60 = scmp.eq.s32.totalorder %s24, 1
      %p61 = por %p59, %p60
      %p63 = scmp.ne.s32.totalorder %s46, %s62
      %p64 = scmp.eq.s32.totalorder %s24, 0
      %p65 = por %p63, %p64
      %s66 = ssub.s32 %s25, %s37
      %s67 = ssub.s32 %s26, %s33
      %s68 = sor.u32 %s66, %s67
      %p69 = scmp.eq.s32.totalorder %s68, 0
      %s71 = sadd.s32 %s70, 1
      %s72 = scalar_select %p69, %s70, %s71
      %p75 = pneg %p69
      %p76 = scmp.eq.s32.totalorder %s18, 1
      %p77 = por %p75, %p76
      %p78 = scmp.ne.s32.totalorder %s70, %s73
      %p79 = scmp.eq.s32.totalorder %s18, 0
      %p80 = por %p78, %p79
      %p81 = scmp.ne.s32.totalorder %s70, %s73
      %p82 = scmp.eq.s32.totalorder %s23, 1
      %p83 = por %p81, %p82
      %p84 = scmp.ne.s32.totalorder %s73, %s74
      %p85 = scmp.eq.s32.totalorder %s23, 0
      %p86 = por %p84, %p85
      %p87 = scmp.ne.s32.totalorder %s73, %s74
      %p88 = scmp.eq.s32.totalorder %s24, 1
      %p89 = por %p87, %p88
      %p91 = scmp.ne.s32.totalorder %s74, %s90
      %p92 = scmp.eq.s32.totalorder %s24, 0
      %p93 = por %p91, %p92
      %s95 = sadd.s32 %s94, 1
      %p98 = scmp.eq.s32.totalorder %s18, 1
      %p99 = scmp.ne.s32.totalorder %s94, %s96
      %p100 = scmp.eq.s32.totalorder %s18, 0
      %p101 = por %p99, %p100
      %p102 = scmp.ne.s32.totalorder %s94, %s96
      %p103 = scmp.eq.s32.totalorder %s23, 1
      %p104 = por %p102, %p103
      %p105 = scmp.ne.s32.totalorder %s96, %s97
      %p106 = scmp.eq.s32.totalorder %s23, 0
      %p107 = por %p105, %p106
      %p108 = scmp.ne.s32.totalorder %s96, %s97
      %p109 = scmp.eq.s32.totalorder %s24, 1
      %p110 = por %p108, %p109
      %p112 = scmp.ne.s32.totalorder %s97, %s111
      %p113 = scmp.eq.s32.totalorder %s24, 0
      %p114 = por %p112, %p113
      %s115 = ssub.s32 %s25, %s37
      %s116 = ssub.s32 %s26, %s33
      %s117 = sor.u32 %s115, %s116
      %p118 = scmp.eq.s32.totalorder %s117, 0
      %s120 = sadd.s32 %s119, 1
      %s121 = scalar_select %p118, %s119, %s120
      %p124 = pneg %p118
      %p125 = scmp.eq.s32.totalorder %s18, 1
      %p126 = por %p124, %p125
      %p127 = scmp.ne.s32.totalorder %s119, %s122
      %p128 = scmp.eq.s32.totalorder %s18, 0
      %p129 = por %p127, %p128
      %p130 = scmp.ne.s32.totalorder %s119, %s122
      %p131 = scmp.eq.s32.totalorder %s23, 1
      %p132 = por %p130, %p131
      %p133 = scmp.ne.s32.totalorder %s122, %s123
      %p134 = scmp.eq.s32.totalorder %s23, 0
      %p135 = por %p133, %p134
      %p136 = scmp.ne.s32.totalorder %s122, %s123
      %p137 = scmp.eq.s32.totalorder %s24, 1
      %p138 = por %p136, %p137
      %p140 = scmp.ne.s32.totalorder %s123, %s139
      %p141 = scmp.eq.s32.totalorder %s24, 0
      %p142 = por %p140, %p141
      %p143 = scmp.le.s32.totalorder 1, %s18
      %p144 = scmp.lt.s32.totalorder %s18, 3
      %p145 = pnand %p143, %p144
      %p146 = pneg %p145
      // Predicated region
      $region9: #{tpu_custom_call.1} parent=5 // pred_check
        _
      $region10: #{tpu_custom_call.1} parent=5 // pred_check_branch
        %148 = sbr.rel (%p145) target = $region12
      $region11: #{tpu_custom_call.1} parent=5 // pred_region
        %s149 = ssub.s32 %s18, 1
        // Predicated region
        $region13: #{tpu_custom_call.1} parent=11 // pred_check
          %p150 = pneg %p107
        $region14: #{tpu_custom_call.1} parent=11 // pred_check_branch
          %152 = sbr.rel (%p150) target = $region16
        $region15: #{tpu_custom_call.1} parent=11 // pred_region
          %s154 = ssub.s32 640, 640
          %155 = vsyncadd [#allocation6], %s154
          %s156 = sshll.u32 [#allocation7], 4
          %s157 = int_to_ptr.vmem [resolvable:$true] %s156
          %162 = dma.hbm_to_vmem [thread:$0]  %s2, 640, %s157, [#allocation6], 64, 64, 4
        $region16: #{tpu_custom_call.1} parent=11 // pred_fallthru
          _
      $region12: #{tpu_custom_call.1} parent=5 // pred_fallthru
        _
      %p163 = scmp.lt.s32.totalorder %s18, 2
      // Predicated region
      $region17: #{tpu_custom_call.1} parent=5 // pred_check
        %p164 = pneg %p163
      $region18: #{tpu_custom_call.1} parent=5 // pred_check_branch
        %166 = sbr.rel (%p164) target = $region20
      $region19: #{tpu_custom_call.1} parent=5 // pred_region
        // Predicated region
        $region21: #{tpu_custom_call.1} parent=19 // pred_check
          %p167 = pneg %p52
        $region22: #{tpu_custom_call.1} parent=19 // pred_check_branch
          %169 = sbr.rel (%p167) target = $region24
        $region23: #{tpu_custom_call.1} parent=19 // pred_region
          %s170 = sand.u32 %s42, 1
          %s171 = scalar_lea.sflag [#allocation3], %s170
          %s172 = sand.u32 %s42, 1
          %s173 = smul.addr %s172, 128
          %s174 = scalar_lea.vmem [#allocation2], %s173
          %s175 = smul.u32 16, %s26
          %s177 = ssub.s32 2048, 2048
          %178 = vsyncadd %s171, %s177
          %s179 = smul.addr %s175, 2
          %s180 = smul.addr %s25, 32
          %s181 = sadd.s32 %s179, %s180
          %s182 = smul.addr %s181, 64
          %s183 = scalar_lea.hbm %s0, %s182
          %s184 = sshll.u32 %s174, 4
          %s185 = int_to_ptr.vmem [resolvable:$true] %s184
          %190 = dma.hbm_to_vmem [thread:$0]  %s183, 2048, %s185, %s171, 64, 64, 4
        $region24: #{tpu_custom_call.1} parent=19 // pred_fallthru
          _
        // Predicated region
        $region25: #{tpu_custom_call.1} parent=19 // pred_check
          %p191 = pneg %p80
        $region26: #{tpu_custom_call.1} parent=19 // pred_check_branch
          %193 = sbr.rel (%p191) target = $region28
        $region27: #{tpu_custom_call.1} parent=19 // pred_region
          %s194 = sand.u32 %s18, 1
          %s195 = scalar_lea.sflag [#allocation6], %s194
          %s196 = sand.u32 %s70, 1
          %s197 = smul.addr %s196, 128
          %s198 = scalar_lea.vmem [#allocation5], %s197
          %s199 = smul.u32 16, %s26
          %s201 = ssub.s32 2048, 2048
          %202 = vsyncadd %s195, %s201
          %s203 = smul.addr %s199, 2
          %s204 = smul.addr %s25, 32
          %s205 = sadd.s32 %s203, %s204
          %s206 = smul.addr %s205, 64
          %s207 = scalar_lea.hbm %s1, %s206
          %s208 = sshll.u32 %s198, 4
          %s209 = int_to_ptr.vmem [resolvable:$true] %s208
          %214 = dma.hbm_to_vmem [thread:$0]  %s207, 2048, %s209, %s195, 64, 64, 4
        $region28: #{tpu_custom_call.1} parent=19 // pred_fallthru
          _
      $region20: #{tpu_custom_call.1} parent=5 // pred_fallthru
        _
      %p215 = scmp.le.s32.totalorder 1, %s18
      %p216 = scmp.lt.s32.totalorder %s18, 3
      %p217 = pnand %p215, %p216
      %p218 = pneg %p217
      // Predicated region
      $region29: #{tpu_custom_call.1} parent=5 // pred_check
        _
      $region30: #{tpu_custom_call.1} parent=5 // pred_check_branch
        %220 = sbr.rel (%p217) target = $region32
      $region31: #{tpu_custom_call.1} parent=5 // pred_region
        %s221 = ssub.s32 %s18, 1
        %s222 = sand.u32 %s45, 1
        %s223 = scalar_lea.sflag [#allocation3], %s222
        %s224 = sand.u32 %s45, 1
        %s225 = smul.addr %s224, 128
        %s226 = scalar_lea.vmem [#allocation2], %s225
        // Predicated region
        $region33: #{tpu_custom_call.1} parent=31 // pred_check
          %p227 = pneg %p58
        $region34: #{tpu_custom_call.1} parent=31 // pred_check_branch
          %229 = sbr.rel (%p227) target = $region36
        $region35: #{tpu_custom_call.1} parent=31 // pred_region
          %230 = dma.done %s223, 2048
        $region36: #{tpu_custom_call.1} parent=31 // pred_fallthru
          _
        %s231 = sand.u32 %s23, 1
        %s232 = scalar_lea.sflag [#allocation6], %s231
        %s233 = sand.u32 %s73, 1
        %s234 = smul.addr %s233, 128
        %s235 = scalar_lea.vmem [#allocation5], %s234
        // Predicated region
        $region37: #{tpu_custom_call.1} parent=31 // pred_check
          %p236 = pneg %p86
        $region38: #{tpu_custom_call.1} parent=31 // pred_check_branch
          %238 = sbr.rel (%p236) target = $region40
        $region39: #{tpu_custom_call.1} parent=31 // pred_region
          %239 = dma.done %s232, 2048
        $region40: #{tpu_custom_call.1} parent=31 // pred_fallthru
          _
        // Predicated region
        $region41: #{tpu_custom_call.1} parent=31 // pred_check
          %p240 = pneg %p107
        $region42: #{tpu_custom_call.1} parent=31 // pred_check_branch
          %242 = sbr.rel (%p240) target = $region44
        $region43: #{tpu_custom_call.1} parent=31 // pred_region
          %243 = dma.done [#allocation6], 640
        $region44: #{tpu_custom_call.1} parent=31 // pred_fallthru
          _
        %s244 = sand.u32 %s45, 1
        %s245 = scalar_lea.sflag [#allocation3], %s244
        %s246 = sand.u32 %s45, 1
        %s247 = smul.addr %s246, 128
        %s248 = scalar_lea.vmem [#allocation2], %s247
        %p249 = pneg %p58
        %p250 = pneg %p55
        %s251 = sand.u32 %s23, 1
        %s252 = scalar_lea.sflag [#allocation6], %s251
        %s253 = sand.u32 %s73, 1
        %s254 = smul.addr %s253, 128
        %s255 = scalar_lea.vmem [#allocation5], %s254
        %p256 = pneg %p86
        %p257 = pneg %p83
        %p258 = pneg %p107
        %p259 = pneg %p104
        %p260 = pneg %p135
        %p261 = pneg %p132
        %s262 = sand.u32 %s122, 1
        %s263 = scalar_lea.sflag [#allocation4], %s262
        %s264 = sand.u32 %s122, 1
        %s265 = smul.addr %s264, 256
        %s266 = scalar_lea.vmem [#allocation8], %s265
        %s267 = smul.u32 16, %s28
        %s268 = smul.u32 16, %s28
        %s269 = smul.u32 16, %s28
        %v272 = vld [vmem:[%s226] sm:$0xf]
        %v273 = vld [vmem:[%s226 + $0x4] sm:$0xf]
        %v274 = vld [vmem:[%s226 + $0x8] sm:$0xf]
        %v275 = vld [vmem:[%s226 + $0xc] sm:$0xf]
        %v276 = vld [vmem:[%s226 + $0x10] sm:$0xf]
        %v277 = vld [vmem:[%s226 + $0x14] sm:$0xf]
        %v278 = vld [vmem:[%s226 + $0x18] sm:$0xf]
        %v279 = vld [vmem:[%s226 + $0x1c] sm:$0xf]
        %v280 = vld [vmem:[%s226 + $0x20] sm:$0xf]
        %v281 = vld [vmem:[%s226 + $0x24] sm:$0xf]
        %v282 = vld [vmem:[%s226 + $0x28] sm:$0xf]
        %v283 = vld [vmem:[%s226 + $0x2c] sm:$0xf]
        %v284 = vld [vmem:[%s226 + $0x30] sm:$0xf]
        %v285 = vld [vmem:[%s226 + $0x34] sm:$0xf]
        %v286 = vld [vmem:[%s226 + $0x38] sm:$0xf]
        %v287 = vld [vmem:[%s226 + $0x3c] sm:$0xf]
        %v288 = vld [vmem:[%s226 + $0x40] sm:$0xf]
        %v289 = vld [vmem:[%s226 + $0x44] sm:$0xf]
        %v290 = vld [vmem:[%s226 + $0x48] sm:$0xf]
        %v291 = vld [vmem:[%s226 + $0x4c] sm:$0xf]
        %v292 = vld [vmem:[%s226 + $0x50] sm:$0xf]
        %v293 = vld [vmem:[%s226 + $0x54] sm:$0xf]
        %v294 = vld [vmem:[%s226 + $0x58] sm:$0xf]
        %v295 = vld [vmem:[%s226 + $0x5c] sm:$0xf]
        %v296 = vld [vmem:[%s226 + $0x60] sm:$0xf]
        %v297 = vld [vmem:[%s226 + $0x64] sm:$0xf]
        %v298 = vld [vmem:[%s226 + $0x68] sm:$0xf]
        %v299 = vld [vmem:[%s226 + $0x6c] sm:$0xf]
        %v300 = vld [vmem:[%s226 + $0x70] sm:$0xf]
        %v301 = vld [vmem:[%s226 + $0x74] sm:$0xf]
        %v302 = vld [vmem:[%s226 + $0x78] sm:$0xf]
        %v303 = vld [vmem:[%s226 + $0x7c] sm:$0xf]
        %v304 = vld [vmem:[%s235] sm:$0xf]
        %v305 = vld [vmem:[%s235 + $0x4] sm:$0xf]
        %v306 = vld [vmem:[%s235 + $0x8] sm:$0xf]
        %v307 = vld [vmem:[%s235 + $0xc] sm:$0xf]
        %v308 = vld [vmem:[%s235 + $0x10] sm:$0xf]
        %v309 = vld [vmem:[%s235 + $0x14] sm:$0xf]
        %v310 = vld [vmem:[%s235 + $0x18] sm:$0xf]
        %v311 = vld [vmem:[%s235 + $0x1c] sm:$0xf]
        %v312 = vld [vmem:[%s235 + $0x20] sm:$0xf]
        %v313 = vld [vmem:[%s235 + $0x24] sm:$0xf]
        %v314 = vld [vmem:[%s235 + $0x28] sm:$0xf]
        %v315 = vld [vmem:[%s235 + $0x2c] sm:$0xf]
        %v316 = vld [vmem:[%s235 + $0x30] sm:$0xf]
        %v317 = vld [vmem:[%s235 + $0x34] sm:$0xf]
        %v318 = vld [vmem:[%s235 + $0x38] sm:$0xf]
        %v319 = vld [vmem:[%s235 + $0x3c] sm:$0xf]
        %v320 = vld [vmem:[%s235 + $0x40] sm:$0xf]
        %v321 = vld [vmem:[%s235 + $0x44] sm:$0xf]
        %v322 = vld [vmem:[%s235 + $0x48] sm:$0xf]
        %v323 = vld [vmem:[%s235 + $0x4c] sm:$0xf]
        %v324 = vld [vmem:[%s235 + $0x50] sm:$0xf]
        %v325 = vld [vmem:[%s235 + $0x54] sm:$0xf]
        %v326 = vld [vmem:[%s235 + $0x58] sm:$0xf]
        %v327 = vld [vmem:[%s235 + $0x5c] sm:$0xf]
        %v328 = vld [vmem:[%s235 + $0x60] sm:$0xf]
        %v329 = vld [vmem:[%s235 + $0x64] sm:$0xf]
        %v330 = vld [vmem:[%s235 + $0x68] sm:$0xf]
        %v331 = vld [vmem:[%s235 + $0x6c] sm:$0xf]
        %v332 = vld [vmem:[%s235 + $0x70] sm:$0xf]
        %v333 = vld [vmem:[%s235 + $0x74] sm:$0xf]
        %v334 = vld [vmem:[%s235 + $0x78] sm:$0xf]
        %v335 = vld [vmem:[%s235 + $0x7c] sm:$0xf]
        %v336 = vsub.bf16 %v304, %v272
        %v337 = vsub.bf16 %v305, %v273
        %v338 = vsub.bf16 %v306, %v274
        %v339 = vsub.bf16 %v307, %v275
        %v340 = vsub.bf16 %v308, %v276
        %v341 = vsub.bf16 %v309, %v277
        %v342 = vsub.bf16 %v310, %v278
        %v343 = vsub.bf16 %v311, %v279
        %v344 = vsub.bf16 %v312, %v280
        %v345 = vsub.bf16 %v313, %v281
        %v346 = vsub.bf16 %v314, %v282
        %v347 = vsub.bf16 %v315, %v283
        %v348 = vsub.bf16 %v316, %v284
        %v349 = vsub.bf16 %v317, %v285
        %v350 = vsub.bf16 %v318, %v286
        %v351 = vsub.bf16 %v319, %v287
        %v352 = vsub.bf16 %v320, %v288
        %v353 = vsub.bf16 %v321, %v289
        %v354 = vsub.bf16 %v322, %v290
        %v355 = vsub.bf16 %v323, %v291
        %v356 = vsub.bf16 %v324, %v292
        %v357 = vsub.bf16 %v325, %v293
        %v358 = vsub.bf16 %v326, %v294
        %v359 = vsub.bf16 %v327, %v295
        %v360 = vsub.bf16 %v328, %v296
        %v361 = vsub.bf16 %v329, %v297
        %v362 = vsub.bf16 %v330, %v298
        %v363 = vsub.bf16 %v331, %v299
        %v364 = vsub.bf16 %v332, %v300
        %v365 = vsub.bf16 %v333, %v301
        %v366 = vsub.bf16 %v334, %v302
        %v367 = vsub.bf16 %v335, %v303
        %v368 = vmax.bf16 %v336, 0
        %v369 = vmax.bf16 %v337, 0
        %v370 = vmax.bf16 %v338, 0
        %v371 = vmax.bf16 %v339, 0
        %v372 = vmax.bf16 %v340, 0
        %v373 = vmax.bf16 %v341, 0
        %v374 = vmax.bf16 %v342, 0
        %v375 = vmax.bf16 %v343, 0
        %v376 = vmax.bf16 %v344, 0
        %v377 = vmax.bf16 %v345, 0
        %v378 = vmax.bf16 %v346, 0
        %v379 = vmax.bf16 %v347, 0
        %v380 = vmax.bf16 %v348, 0
        %v381 = vmax.bf16 %v349, 0
        %v382 = vmax.bf16 %v350, 0
        %v383 = vmax.bf16 %v351, 0
        %v384 = vmax.bf16 %v352, 0
        %v385 = vmax.bf16 %v353, 0
        %v386 = vmax.bf16 %v354, 0
        %v387 = vmax.bf16 %v355, 0
        %v388 = vmax.bf16 %v356, 0
        %v389 = vmax.bf16 %v357, 0
        %v390 = vmax.bf16 %v358, 0
        %v391 = vmax.bf16 %v359, 0
        %v392 = vmax.bf16 %v360, 0
        %v393 = vmax.bf16 %v361, 0
        %v394 = vmax.bf16 %v362, 0
        %v395 = vmax.bf16 %v363, 0
        %v396 = vmax.bf16 %v364, 0
        %v397 = vmax.bf16 %v365, 0
        %v398 = vmax.bf16 %v366, 0
        %v399 = vmax.bf16 %v367, 0
        %v400 = vmul.bf16 %v368, 1073758208
        %v401 = vmul.bf16 %v369, 1073758208
        %v402 = vmul.bf16 %v370, 1073758208
        %v403 = vmul.bf16 %v371, 1073758208
        %v404 = vmul.bf16 %v372, 1073758208
        %v405 = vmul.bf16 %v373, 1073758208
        %v406 = vmul.bf16 %v374, 1073758208
        %v407 = vmul.bf16 %v375, 1073758208
        %v408 = vmul.bf16 %v376, 1073758208
        %v409 = vmul.bf16 %v377, 1073758208
        %v410 = vmul.bf16 %v378, 1073758208
        %v411 = vmul.bf16 %v379, 1073758208
        %v412 = vmul.bf16 %v380, 1073758208
        %v413 = vmul.bf16 %v381, 1073758208
        %v414 = vmul.bf16 %v382, 1073758208
        %v415 = vmul.bf16 %v383, 1073758208
        %v416 = vmul.bf16 %v384, 1073758208
        %v417 = vmul.bf16 %v385, 1073758208
        %v418 = vmul.bf16 %v386, 1073758208
        %v419 = vmul.bf16 %v387, 1073758208
        %v420 = vmul.bf16 %v388, 1073758208
        %v421 = vmul.bf16 %v389, 1073758208
        %v422 = vmul.bf16 %v390, 1073758208
        %v423 = vmul.bf16 %v391, 1073758208
        %v424 = vmul.bf16 %v392, 1073758208
        %v425 = vmul.bf16 %v393, 1073758208
        %v426 = vmul.bf16 %v394, 1073758208
        %v427 = vmul.bf16 %v395, 1073758208
        %v428 = vmul.bf16 %v396, 1073758208
        %v429 = vmul.bf16 %v397, 1073758208
        %v430 = vmul.bf16 %v398, 1073758208
        %v431 = vmul.bf16 %v399, 1073758208
        %v432 = vadd.bf16 %v272, %v400
        %v433 = vadd.bf16 %v273, %v401
        %v434 = vadd.bf16 %v274, %v402
        %v435 = vadd.bf16 %v275, %v403
        %v436 = vadd.bf16 %v276, %v404
        %v437 = vadd.bf16 %v277, %v405
        %v438 = vadd.bf16 %v278, %v406
        %v439 = vadd.bf16 %v279, %v407
        %v440 = vadd.bf16 %v280, %v408
        %v441 = vadd.bf16 %v281, %v409
        %v442 = vadd.bf16 %v282, %v410
        %v443 = vadd.bf16 %v283, %v411
        %v444 = vadd.bf16 %v284, %v412
        %v445 = vadd.bf16 %v285, %v413
        %v446 = vadd.bf16 %v286, %v414
        %v447 = vadd.bf16 %v287, %v415
        %v448 = vadd.bf16 %v288, %v416
        %v449 = vadd.bf16 %v289, %v417
        %v450 = vadd.bf16 %v290, %v418
        %v451 = vadd.bf16 %v291, %v419
        %v452 = vadd.bf16 %v292, %v420
        %v453 = vadd.bf16 %v293, %v421
        %v454 = vadd.bf16 %v294, %v422
        %v455 = vadd.bf16 %v295, %v423
        %v456 = vadd.bf16 %v296, %v424
        %v457 = vadd.bf16 %v297, %v425
        %v458 = vadd.bf16 %v298, %v426
        %v459 = vadd.bf16 %v299, %v427
        %v460 = vadd.bf16 %v300, %v428
        %v461 = vadd.bf16 %v301, %v429
        %v462 = vadd.bf16 %v302, %v430
        %v463 = vadd.bf16 %v303, %v431
        %v464 = vld [vmem:[#allocation7] sm:$0xf]
        %v465 = vld [vmem:[#allocation7 + $0x4] sm:$0xf]
        %v466 = vld [vmem:[#allocation7 + $0x8] sm:$0xf]
        %v467 = vld [vmem:[#allocation7 + $0xc] sm:$0xf]
        %v468 = vld [vmem:[#allocation7 + $0x10] sm:$0xf]
        %v469 = vld [vmem:[#allocation7 + $0x14] sm:$0xf]
        %v470 = vld [vmem:[#allocation7 + $0x18] sm:$0xf]
        %v471 = vld [vmem:[#allocation7 + $0x1c] sm:$0xf]
        %v472 = vld [vmem:[#allocation7 + $0x20] sm:$0xf]
        %v473 = vld [vmem:[#allocation7 + $0x24] sm:$0x3]
        %v506 = vunpack.c.l.b16 %v432
        %v507 = vunpack.c.l.b16 %v433
        %v508 = vunpack.c.l.b16 %v434
        %v509 = vunpack.c.l.b16 %v435
        %v510 = vunpack.c.l.b16 %v436
        %v511 = vunpack.c.l.b16 %v437
        %v512 = vunpack.c.l.b16 %v438
        %v513 = vunpack.c.l.b16 %v439
        %v514 = vunpack.c.l.b16 %v440
        %v515 = vunpack.c.l.b16 %v441
        %v516 = vunpack.c.l.b16 %v442
        %v517 = vunpack.c.l.b16 %v443
        %v518 = vunpack.c.l.b16 %v444
        %v519 = vunpack.c.l.b16 %v445
        %v520 = vunpack.c.l.b16 %v446
        %v521 = vunpack.c.l.b16 %v447
        %v522 = vunpack.c.l.b16 %v448
        %v523 = vunpack.c.l.b16 %v449
        %v524 = vunpack.c.l.b16 %v450
        %v525 = vunpack.c.l.b16 %v451
        %v526 = vunpack.c.l.b16 %v452
        %v527 = vunpack.c.l.b16 %v453
        %v528 = vunpack.c.l.b16 %v454
        %v529 = vunpack.c.l.b16 %v455
        %v530 = vunpack.c.l.b16 %v456
        %v531 = vunpack.c.l.b16 %v457
        %v532 = vunpack.c.l.b16 %v458
        %v533 = vunpack.c.l.b16 %v459
        %v534 = vunpack.c.l.b16 %v460
        %v535 = vunpack.c.l.b16 %v461
        %v536 = vunpack.c.l.b16 %v462
        %v537 = vunpack.c.l.b16 %v463
        %v538 = vpack.c.b16 %v507, %v506
        %v539 = vpack.c.b16 %v509, %v508
        %v540 = vpack.c.b16 %v511, %v510
        %v541 = vpack.c.b16 %v513, %v512
        %v542 = vpack.c.b16 %v515, %v514
        %v543 = vpack.c.b16 %v517, %v516
        %v544 = vpack.c.b16 %v519, %v518
        %v545 = vpack.c.b16 %v521, %v520
        %v546 = vpack.c.b16 %v523, %v522
        %v547 = vpack.c.b16 %v525, %v524
        %v548 = vpack.c.b16 %v527, %v526
        %v549 = vpack.c.b16 %v529, %v528
        %v550 = vpack.c.b16 %v531, %v530
        %v551 = vpack.c.b16 %v533, %v532
        %v552 = vpack.c.b16 %v535, %v534
        %v553 = vpack.c.b16 %v537, %v536
        %v564 = vunpack.c.l.b16 %v464
        %v565 = vunpack.c.l.b16 %v465
        %v566 = vunpack.c.l.b16 %v466
        %v567 = vunpack.c.l.b16 %v467
        %v568 = vunpack.c.l.b16 %v468
        %v569 = vunpack.c.l.b16 %v469
        %v570 = vunpack.c.l.b16 %v470
        %v571 = vunpack.c.l.b16 %v471
        %v572 = vunpack.c.l.b16 %v472
        %v573 = vunpack.c.l.b16 %v473
        %v574 = vpack.c.b16 %v565, %v564
        %v575 = vpack.c.b16 %v567, %v566
        %v576 = vpack.c.b16 %v569, %v568
        %v577 = vpack.c.b16 %v571, %v570
        %v578 = vpack.c.b16 %v573, %v572
        %vm583 = vcmask 613376
        %v585 = vsel %vm583, %v538, 0
        %v588 = vsel %vm583, %v539, 0
        %v591 = vsel %vm583, %v540, 0
        %v594 = vsel %vm583, %v541, 0
        %v597 = vsel %vm583, %v542, 0
        %v600 = vsel %vm583, %v543, 0
        %v603 = vsel %vm583, %v544, 0
        %v606 = vsel %vm583, %v545, 0
        %v609 = vsel %vm583, %v546, 0
        %v612 = vsel %vm583, %v547, 0
        %v615 = vsel %vm583, %v548, 0
        %v618 = vsel %vm583, %v549, 0
        %v621 = vsel %vm583, %v550, 0
        %v624 = vsel %vm583, %v551, 0
        %v627 = vsel %vm583, %v552, 0
        %v630 = vsel %vm583, %v553, 0
        %vm632 = vcmask 1044480
        %vm633 = vcmask 1045504
        %v634 = vsel %vm632, 4294967295, 65535
        %v635 = vsel %vm633, %v634, 0
        %v637 = vand.u32 %v578, %v635
        %639 = vmatprep.subr.bf16.mxu0 0
        %640 = vmatpush1.bf16.msra.mxu0 %v574
        %641 = vmatprep.subr.bf16.mxu0 0
        %642 = vmatpush1.bf16.msra.mxu0 %v575
        %643 = vmatprep.subr.bf16.mxu0 0
        %644 = vmatpush1.bf16.msra.mxu0 %v576
        %645 = vmatprep.subr.bf16.mxu0 0
        %646 = vmatpush1.bf16.msra.mxu0 %v577
        %647 = vmatprep.subr.bf16.mxu0 0
        %648 = vmatpush1.bf16.msra.mxu0 %v637
        %649 = vmatprep.subr.bf16.mxu0 0
        %650 = vmatpush1.bf16.msra.mxu0 0
        %651 = vmatprep.subr.bf16.mxu0 0
        %652 = vmatpush1.bf16.msra.mxu0 0
        %653 = vmatprep.subr.bf16.mxu0 0
        %654 = vmatpush1.bf16.msra.mxu0 0
        %655 = vmatprep.subr.bf16.mxu0 0
        %656 = vmatpush1.bf16.msra.mxu0 0
        %657 = vmatprep.subr.bf16.mxu0 0
        %658 = vmatpush1.bf16.msra.mxu0 0
        %659 = vmatprep.subr.bf16.mxu0 0
        %660 = vmatpush1.bf16.msra.mxu0 0
        %661 = vmatprep.subr.bf16.mxu0 0
        %662 = vmatpush1.bf16.msra.mxu0 0
        %663 = vmatprep.subr.bf16.mxu0 0
        %664 = vmatpush1.bf16.msra.mxu0 0
        %665 = vmatprep.subr.bf16.mxu0 0
        %666 = vmatpush1.bf16.msra.mxu0 0
        %667 = vmatprep.subr.bf16.mxu0 0
        %668 = vmatpush1.bf16.msra.mxu0 0
        %669 = vmatprep.subr.bf16.mxu0 0
        %670 = vmatpush1.bf16.msra.mxu0 0
        %671 = vmatprep.mubr.bf16.mxu0 0
        %672 = vmatmul.mubr.bf16.gmra.mrb[0].mxu0 %v585
        %v673 = vpop.f32.mrb[0].mxu0
        %v674 = vadd.f32 0.0, %v673
        %v675 = vpop.f32.mrb[0].mxu0
        %v676 = vpop.f32.mrb[0].mxu0
        %v677 = vadd.f32 0.0, %v676
        %v678 = vpop.f32.mrb[0].mxu0
        %679 = vmatprep.mubr.bf16.mxu0 0
        %680 = vmatmul.mubr.bf16.gmra.mrb[0].mxu0 %v588
        %v681 = vpop.f32.mrb[0].mxu0
        %v682 = vadd.f32 0.0, %v681
        %v683 = vpop.f32.mrb[0].mxu0
        %v684 = vpop.f32.mrb[0].mxu0
        %v685 = vadd.f32 0.0, %v684
        %v686 = vpop.f32.mrb[0].mxu0
        %687 = vmatprep.mubr.bf16.mxu0 0
        %688 = vmatmul.mubr.bf16.gmra.mrb[0].mxu0 %v591
        %v689 = vpop.f32.mrb[0].mxu0
        %v690 = vadd.f32 0.0, %v689
        %v691 = vpop.f32.mrb[0].mxu0
        %v692 = vpop.f32.mrb[0].mxu0
        %v693 = vadd.f32 0.0, %v692
        %v694 = vpop.f32.mrb[0].mxu0
        %695 = vmatprep.mubr.bf16.mxu0 0
        %696 = vmatmul.mubr.bf16.gmra.mrb[0].mxu0 %v594
        %v697 = vpop.f32.mrb[0].mxu0
        %v698 = vadd.f32 0.0, %v697
        %v699 = vpop.f32.mrb[0].mxu0
        %v700 = vpop.f32.mrb[0].mxu0
        %v701 = vadd.f32 0.0, %v700
        %v702 = vpop.f32.mrb[0].mxu0
        %703 = vmatprep.mubr.bf16.mxu0 0
        %704 = vmatmul.mubr.bf16.gmra.mrb[0].mxu0 %v597
        %v705 = vpop.f32.mrb[0].mxu0
        %v706 = vadd.f32 0.0, %v705
        %v707 = vpop.f32.mrb[0].mxu0
        %v708 = vpop.f32.mrb[0].mxu0
        %v709 = vadd.f32 0.0, %v708
        %v710 = vpop.f32.mrb[0].mxu0
        %711 = vmatprep.mubr.bf16.mxu0 0
        %712 = vmatmul.mubr.bf16.gmra.mrb[0].mxu0 %v600
        %v713 = vpop.f32.mrb[0].mxu0
        %v714 = vadd.f32 0.0, %v713
        %v715 = vpop.f32.mrb[0].mxu0
        %v716 = vpop.f32.mrb[0].mxu0
        %v717 = vadd.f32 0.0, %v716
        %v718 = vpop.f32.mrb[0].mxu0
        %719 = vmatprep.mubr.bf16.mxu0 0
        %720 = vmatmul.mubr.bf16.gmra.mrb[0].mxu0 %v603
        %v721 = vpop.f32.mrb[0].mxu0
        %v722 = vadd.f32 0.0, %v721
        %v723 = vpop.f32.mrb[0].mxu0
        %v724 = vpop.f32.mrb[0].mxu0
        %v725 = vadd.f32 0.0, %v724
        %v726 = vpop.f32.mrb[0].mxu0
        %727 = vmatprep.mubr.bf16.mxu0 0
        %728 = vmatmul.mubr.bf16.gmra.mrb[0].mxu0 %v606
        %v729 = vpop.f32.mrb[0].mxu0
        %v730 = vadd.f32 0.0, %v729
        %v731 = vpop.f32.mrb[0].mxu0
        %v732 = vpop.f32.mrb[0].mxu0
        %v733 = vadd.f32 0.0, %v732
        %v734 = vpop.f32.mrb[0].mxu0
        %735 = vmatprep.mubr.bf16.mxu0 0
        %736 = vmatmul.mubr.bf16.gmra.mrb[0].mxu0 %v609
        %v737 = vpop.f32.mrb[0].mxu0
        %v738 = vadd.f32 0.0, %v737
        %v739 = vpop.f32.mrb[0].mxu0
        %v740 = vpop.f32.mrb[0].mxu0
        %v741 = vadd.f32 0.0, %v740
        %v742 = vpop.f32.mrb[0].mxu0
        %743 = vmatprep.mubr.bf16.mxu0 0
        %744 = vmatmul.mubr.bf16.gmra.mrb[0].mxu0 %v612
        %v745 = vpop.f32.mrb[0].mxu0
        %v746 = vadd.f32 0.0, %v745
        %v747 = vpop.f32.mrb[0].mxu0
        %v748 = vpop.f32.mrb[0].mxu0
        %v749 = vadd.f32 0.0, %v748
        %v750 = vpop.f32.mrb[0].mxu0
        %751 = vmatprep.mubr.bf16.mxu0 0
        %752 = vmatmul.mubr.bf16.gmra.mrb[0].mxu0 %v615
        %v753 = vpop.f32.mrb[0].mxu0
        %v754 = vadd.f32 0.0, %v753
        %v755 = vpop.f32.mrb[0].mxu0
        %v756 = vpop.f32.mrb[0].mxu0
        %v757 = vadd.f32 0.0, %v756
        %v758 = vpop.f32.mrb[0].mxu0
        %759 = vmatprep.mubr.bf16.mxu0 0
        %760 = vmatmul.mubr.bf16.gmra.mrb[0].mxu0 %v618
        %v761 = vpop.f32.mrb[0].mxu0
        %v762 = vadd.f32 0.0, %v761
        %v763 = vpop.f32.mrb[0].mxu0
        %v764 = vpop.f32.mrb[0].mxu0
        %v765 = vadd.f32 0.0, %v764
        %v766 = vpop.f32.mrb[0].mxu0
        %767 = vmatprep.mubr.bf16.mxu0 0
        %768 = vmatmul.mubr.bf16.gmra.mrb[0].mxu0 %v621
        %v769 = vpop.f32.mrb[0].mxu0
        %v770 = vadd.f32 0.0, %v769
        %v771 = vpop.f32.mrb[0].mxu0
        %v772 = vpop.f32.mrb[0].mxu0
        %v773 = vadd.f32 0.0, %v772
        %v774 = vpop.f32.mrb[0].mxu0
        %775 = vmatprep.mubr.bf16.mxu0 0
        %776 = vmatmul.mubr.bf16.gmra.mrb[0].mxu0 %v624
        %v777 = vpop.f32.mrb[0].mxu0
        %v778 = vadd.f32 0.0, %v777
        %v779 = vpop.f32.mrb[0].mxu0
        %v780 = vpop.f32.mrb[0].mxu0
        %v781 = vadd.f32 0.0, %v780
        %v782 = vpop.f32.mrb[0].mxu0
        %783 = vmatprep.mubr.bf16.mxu0 0
        %784 = vmatmul.mubr.bf16.gmra.mrb[0].mxu0 %v627
        %v785 = vpop.f32.mrb[0].mxu0
        %v786 = vadd.f32 0.0, %v785
        %v787 = vpop.f32.mrb[0].mxu0
        %v788 = vpop.f32.mrb[0].mxu0
        %v789 = vadd.f32 0.0, %v788
        %v790 = vpop.f32.mrb[0].mxu0
        %791 = vmatprep.mubr.bf16.mxu0 0
        %792 = vmatmul.mubr.bf16.gmra.mrb[0].mxu0 %v630
        %v793 = vpop.f32.mrb[0].mxu0
        %v794 = vadd.f32 0.0, %v793
        %v795 = vpop.f32.mrb[0].mxu0
        %v796 = vpop.f32.mrb[0].mxu0
        %v797 = vadd.f32 0.0, %v796
        %v798 = vpop.f32.mrb[0].mxu0
        %799 = vdwg.mxu0
        %800 = vst [vmem:[%s266] sm:$0xff] %v674
        %801 = vst [vmem:[%s266 + $0x8] sm:$0xff] %v677
        %802 = vst [vmem:[%s266 + $0x10] sm:$0xff] %v682
        %803 = vst [vmem:[%s266 + $0x18] sm:$0xff] %v685
        %804 = vst [vmem:[%s266 + $0x20] sm:$0xff] %v690
        %805 = vst [vmem:[%s266 + $0x28] sm:$0xff] %v693
        %806 = vst [vmem:[%s266 + $0x30] sm:$0xff] %v698
        %807 = vst [vmem:[%s266 + $0x38] sm:$0xff] %v701
        %808 = vst [vmem:[%s266 + $0x40] sm:$0xff] %v706
        %809 = vst [vmem:[%s266 + $0x48] sm:$0xff] %v709
        %810 = vst [vmem:[%s266 + $0x50] sm:$0xff] %v714
        %811 = vst [vmem:[%s266 + $0x58] sm:$0xff] %v717
        %812 = vst [vmem:[%s266 + $0x60] sm:$0xff] %v722
        %813 = vst [vmem:[%s266 + $0x68] sm:$0xff] %v725
        %814 = vst [vmem:[%s266 + $0x70] sm:$0xff] %v730
        %815 = vst [vmem:[%s266 + $0x78] sm:$0xff] %v733
        %816 = vst [vmem:[%s266 + $0x80] sm:$0xff] %v738
        %817 = vst [vmem:[%s266 + $0x88] sm:$0xff] %v741
        %818 = vst [vmem:[%s266 + $0x90] sm:$0xff] %v746
        %819 = vst [vmem:[%s266 + $0x98] sm:$0xff] %v749
        %820 = vst [vmem:[%s266 + $0xa0] sm:$0xff] %v754
        %821 = vst [vmem:[%s266 + $0xa8] sm:$0xff] %v757
        %822 = vst [vmem:[%s266 + $0xb0] sm:$0xff] %v762
        %823 = vst [vmem:[%s266 + $0xb8] sm:$0xff] %v765
        %824 = vst [vmem:[%s266 + $0xc0] sm:$0xff] %v770
        %825 = vst [vmem:[%s266 + $0xc8] sm:$0xff] %v773
        %826 = vst [vmem:[%s266 + $0xd0] sm:$0xff] %v778
        %827 = vst [vmem:[%s266 + $0xd8] sm:$0xff] %v781
        %828 = vst [vmem:[%s266 + $0xe0] sm:$0xff] %v786
        %829 = vst [vmem:[%s266 + $0xe8] sm:$0xff] %v789
        %830 = vst [vmem:[%s266 + $0xf0] sm:$0xff] %v794
        %831 = vst [vmem:[%s266 + $0xf8] sm:$0xff] %v797
        %s832 = sand.u32 %s122, 1
        %s833 = scalar_lea.sflag [#allocation4], %s832
        %s834 = sand.u32 %s122, 1
        %s835 = smul.addr %s834, 256
        %s836 = scalar_lea.vmem [#allocation8], %s835
        // Predicated region
        $region45: #{tpu_custom_call.1} parent=31 // pred_check
          %p837 = pneg %p132
        $region46: #{tpu_custom_call.1} parent=31 // pred_check_branch
          %839 = sbr.rel (%p837) target = $region48
        $region47: #{tpu_custom_call.1} parent=31 // pred_region
          %s840 = smul.u32 16, %s28
          %s842 = ssub.s32 4096, 4096
          %843 = vsyncadd %s833, %s842
          %s844 = smul.addr %s840, 2
          %s845 = smul.addr %s27, 32
          %s846 = sadd.s32 %s844, %s845
          %s847 = smul.addr %s846, 128
          %s848 = scalar_lea.hbm %s3, %s847
          %s849 = sshll.u32 %s836, 4
          %s850 = int_to_ptr.vmem [resolvable:$true] %s849
          %855 = dma.vmem_to_hbm [thread:$0]  %s850, 4096, %s848, %s833, 128, 128, 8
        $region48: #{tpu_custom_call.1} parent=31 // pred_fallthru
          _
      $region32: #{tpu_custom_call.1} parent=5 // pred_fallthru
        _
      %p856 = scmp.le.s32.totalorder 2, %s18
      // Predicated region
      $region49: #{tpu_custom_call.1} parent=5 // pred_check
        %p857 = pneg %p856
      $region50: #{tpu_custom_call.1} parent=5 // pred_check_branch
        %859 = sbr.rel (%p857) target = $region52
      $region51: #{tpu_custom_call.1} parent=5 // pred_region
        %s860 = ssub.s32 %s18, 2
        // Predicated region
        $region53: #{tpu_custom_call.1} parent=51 // pred_check
          %p861 = pneg %p138
        $region54: #{tpu_custom_call.1} parent=51 // pred_check_branch
          %863 = sbr.rel (%p861) target = $region56
        $region55: #{tpu_custom_call.1} parent=51 // pred_region
          %s864 = sand.u32 %s123, 1
          %s865 = scalar_lea.sflag [#allocation4], %s864
          %s866 = sand.u32 %s123, 1
          %s867 = smul.addr %s866, 256
          %s868 = scalar_lea.vmem [#allocation8], %s867
          %869 = dma.done %s865, 4096
        $region56: #{tpu_custom_call.1} parent=51 // pred_fallthru
          _
      $region52: #{tpu_custom_call.1} parent=5 // pred_fallthru
        _
    $region6: #{tpu_custom_call.1} parent=1 // loop_footer
      %s22 = sadd.s32 1, %s18
    $region7: #{tpu_custom_call.1} parent=1 // loop_footer_branch
      %17 = sbr.rel target = $region3
    $region8: #{tpu_custom_call.1} parent=1 // loop_exit
      _
    %870 = vsyncpa [#allocation3], 1
    %s871 = scalar_lea.sflag [#allocation3], 1
    %872 = vsyncpa %s871, 1
    %873 = vsyncpa [#allocation6], 1
    %s874 = scalar_lea.sflag [#allocation6], 1
    %875 = vsyncpa %s874, 1
    %876 = vsyncpa [#allocation4], 1
    %s877 = scalar_lea.sflag [#allocation4], 1
    %878 = vsyncpa %s877, 1

</llo_original>
